<compile_context>
chip_gen: v7x
topology: tpu7x:2x2x1
jax: 0.10.0
libtpu: 0.0.40
codegen_flags: <defaults>
</compile_context>

<pallas_src>
import functools
import math

import jax
import jax.numpy as jnp
from jax.experimental import pallas as pl
from jax.experimental.pallas import tpu as pltpu


# ------------------------------ fused kernel ---------------------------------

def _fused_mlp_kernel(x_ref, w_ref, b_ref, o_ref, *, in_dim, n_layers):
    """x_ref: (B_pad, in_dim) f32
       w_ref: (L, Kmax, Nmax) bf16  -- zero-padded, all layers stacked
       b_ref: (L, Nmax)       f32  -- zero-padded, all layers stacked
       o_ref: (B_pad, Nmax)   f32
    Zero-padding is semantics-preserving: padded W rows/cols and bias entries
    are zero, ReLU(0) = 0 keeps padded columns zero into the next layer, and
    padded sigmoid columns are sliced off by the wrapper."""
    b_all = b_ref[...]                                    # tiny, load once
    h = x_ref[...]                                        # (B_pad, in_dim) f32
    for i in range(n_layers):
        w = w_ref[i]                                      # (Kmax, Nmax) bf16
        if i == 0:
            w = w[:in_dim, :]                             # logical K, no zero-FLOP pad
        # bf16 MXU matmul with f32 accumulation; bias add on VPU in f32.
        y = jnp.dot(h.astype(jnp.bfloat16), w,
                    preferred_element_type=jnp.float32) + b_all[i:i + 1, :]
        if i < n_layers - 1:
            h = jnp.maximum(y, 0.0)                       # ReLU (VPU)
        else:
            e = jnp.exp(-y)                               # EUP
            h = pl.reciprocal(1.0 + e, approx=False)      # exact sigmoid, <= 1.0
    o_ref[...] = h.astype(o_ref.dtype)


# ------------------------------ wrapper ---------------------------------------

def _round_up(x, m):
    return ((x + m - 1) // m) * m


def prepare_params(params, weight_dtype=jnp.bfloat16):
    """One-time (init-time) packing: pad every layer to lane-dense (Kmax, Nmax),
    cast weights to bf16, stack weights and biases into single buffers so the
    per-call kernel sees exactly 3 inputs (x, W-stack, b-stack)."""
    n_layers = len(params)
    in_dims = [w.shape[0] for w, _ in params]
    out_dims = [w.shape[1] for w, _ in params]

    # Contraction dims: layer 0 keeps the logical input width (only W0's
    # sublane dim needs 8-alignment, handled by Kmax); deeper layers consume
    # the previous layer's lane-padded (128-multiple) output.
    k_dims = [in_dims[0]] + [_round_up(d, 128) for d in out_dims[:-1]]
    n_dims = [_round_up(d, 128) for d in out_dims]
    k_max = _round_up(max(k_dims), 8)
    n_max = max(n_dims)

    w_stack = jnp.zeros((n_layers, k_max, n_max), weight_dtype)
    b_stack = jnp.zeros((n_layers, n_max), jnp.float32)
    for i, (w, b) in enumerate(params):
        w_stack = w_stack.at[i, :w.shape[0], :w.shape[1]].set(w.astype(weight_dtype))
        b_stack = b_stack.at[i, :b.shape[1]].set(b.reshape(-1))

    meta = dict(in_dim=in_dims[0], out_dim=out_dims[-1],
                n_layers=n_layers, k_max=k_max, n_max=n_max)
    return w_stack, b_stack, meta


def mlp_forward(x, w_stack, b_stack, *, meta):
    """Hot path: pad batch only, run one fused pallas_call, slice the result."""
    B, in_dim = x.shape
    assert in_dim == meta["in_dim"]
    B_pad = _round_up(max(B, 1), 8)
    x_p = jnp.pad(x, ((0, B_pad - B), (0, 0)))            # single tiny per-call pad

    n_layers, k_max, n_max = meta["n_layers"], meta["k_max"], meta["n_max"]
    flops = 2 * B_pad * (in_dim * n_max + (n_layers - 1) * k_max * n_max)
    transcendentals = B_pad * n_max                        # exp in the sigmoid
    bytes_accessed = (4 * x_p.size + 2 * int(w_stack.size)
                      + 4 * int(b_stack.size) + 4 * B_pad * n_max)

    kernel = functools.partial(_fused_mlp_kernel,
                               in_dim=in_dim, n_layers=n_layers)

    out_p = pl.pallas_call(
        kernel,
        out_shape=jax.ShapeDtypeStruct((B_pad, n_max), jnp.float32),
        in_specs=[pl.BlockSpec(memory_space=pltpu.VMEM)] * 3,
        out_specs=pl.BlockSpec(memory_space=pltpu.VMEM),
        cost_estimate=pl.CostEstimate(flops=flops,
                                      transcendentals=transcendentals,
                                      bytes_accessed=bytes_accessed),
    )(x_p, w_stack, b_stack)

    return out_p[:B, :meta["out_dim"]]


# --------------------------- params / reference -------------------------------

def init_params(key, neurons):
    """PyTorch-Linear-style init: U(-1/sqrt(fan_in), 1/sqrt(fan_in)).
    Weights stored as (in, out) == W_pytorch.T so the kernel does x @ W."""
    params = []
    for i in range(len(neurons) - 1):
        fan_in, fan_out = neurons[i], neurons[i + 1]
        key, kw, kb = jax.random.split(key, 3)
        bound = 1.0 / math.sqrt(fan_in)
        w = jax.random.uniform(kw, (fan_in, fan_out), jnp.float32, -bound, bound)
        b = jax.random.uniform(kb, (1, fan_out), jnp.float32, -bound, bound)
        params.append((w, b))
    return params


def reference_forward(x, params):
    h = x
    for i, (w, b) in enumerate(params):
        y = h @ w + b
        h = jnp.maximum(y, 0.0) if i < len(params) - 1 else jax.nn.sigmoid(y)
    return h


# ------------------------------- main ------------------------------------------

if __name__ == "__main__":
    neurons = [16, 32, 64, 8]   # NeuralNetwork(neurons): 3 Linear layers
    batch = 4

    key = jax.random.PRNGKey(0)
    key, kx = jax.random.split(key)
    x = jax.random.normal(kx, (batch, neurons[0]), jnp.float32)
    params = init_params(key, neurons)

    # One-time padding / packing / bf16 cast — out of the per-call hot path.
    w_stack, b_stack, meta = prepare_params(params)

    fwd = jax.jit(functools.partial(mlp_forward, meta=meta))
    y = jax.block_until_ready(fwd(x, w_stack, b_stack))

    assert y.shape == (batch, neurons[-1])
    assert bool(jnp.all((y >= 0.0) & (y <= 1.0)))          # exact sigmoid range

    # Reference in full f32; kernel matmuls are bf16 (f32 accumulate), so use
    # a bf16-appropriate tolerance.
    y_ref = reference_forward(x, params)
    assert bool(jnp.allclose(y, y_ref, atol=2e-2, rtol=2e-2)), \
        f"max abs err {float(jnp.max(jnp.abs(y - y_ref)))}"

    print("KERNEL_OK")
</pallas_src>

<mosaic_0001>
module attributes {stable_mosaic.version = 11 : i64} {
  func.func @_fused_mlp_kernel(%arg0: memref<8x16xf32, #tpu.memory_space<vmem>>, %arg1: memref<3x128x128xbf16, #tpu.memory_space<vmem>>, %arg2: memref<3x128xf32, #tpu.memory_space<vmem>>, %arg3: memref<8x128xf32, #tpu.memory_space<vmem>>) attributes {dimension_semantics = [], scalar_prefetch = 0 : i64, scratch_operands = 0 : i64, tpu.core_type = #tpu.core_type<tc>} {
    %c0 = arith.constant 0 : index
    %c0_0 = arith.constant 0 : index
    %0 = vector.load %arg2[%c0, %c0_0] : memref<3x128xf32, #tpu.memory_space<vmem>>, vector<3x128xf32>
    %c0_1 = arith.constant 0 : index
    %c0_2 = arith.constant 0 : index
    %1 = vector.load %arg0[%c0_1, %c0_2] : memref<8x16xf32, #tpu.memory_space<vmem>>, vector<8x16xf32>
    %c0_3 = arith.constant 0 : index
    %c0_4 = arith.constant 0 : index
    %c0_5 = arith.constant 0 : index
    %2 = vector.load %arg1[%c0_3, %c0_4, %c0_5] : memref<3x128x128xbf16, #tpu.memory_space<vmem>>, vector<1x128x128xbf16>
    %3 = vector.shape_cast %2 : vector<1x128x128xbf16> to vector<128x128xbf16>
    %4 = vector.extract_strided_slice %3 {offsets = [0, 0], sizes = [16, 128], strides = [1, 1]} : vector<128x128xbf16> to vector<16x128xbf16>
    %5 = arith.truncf %1 : vector<8x16xf32> to vector<8x16xbf16>
    %cst = arith.constant dense<0.000000e+00> : vector<8x128xf32>
    %6 = tpu.matmul %5, %4, %cst {dimension_numbers = #tpu.dot_dimension_numbers<[1], [0], [0], [1], [0, 0, 1, 1], [], []>} : vector<8x16xbf16>, vector<16x128xbf16>, vector<8x128xf32> -> vector<8x128xf32>
    %7 = vector.extract_strided_slice %0 {offsets = [0, 0], sizes = [1, 128], strides = [1, 1]} : vector<3x128xf32> to vector<1x128xf32>
    %8 = vector.broadcast %7 : vector<1x128xf32> to vector<8x128xf32>
    %9 = arith.addf %6, %8 : vector<8x128xf32>
    %cst_6 = arith.constant 0.000000e+00 : f32
    %10 = vector.broadcast %cst_6 : f32 to vector<8x128xf32>
    %11 = arith.maximumf %9, %10 : vector<8x128xf32>
    %c1 = arith.constant 1 : index
    %c0_7 = arith.constant 0 : index
    %c0_8 = arith.constant 0 : index
    %12 = vector.load %arg1[%c1, %c0_7, %c0_8] : memref<3x128x128xbf16, #tpu.memory_space<vmem>>, vector<1x128x128xbf16>
    %13 = vector.shape_cast %12 : vector<1x128x128xbf16> to vector<128x128xbf16>
    %14 = arith.truncf %11 : vector<8x128xf32> to vector<8x128xbf16>
    %cst_9 = arith.constant dense<0.000000e+00> : vector<8x128xf32>
    %15 = tpu.matmul %14, %13, %cst_9 {dimension_numbers = #tpu.dot_dimension_numbers<[1], [0], [0], [1], [0, 0, 1, 1], [], []>} : vector<8x128xbf16>, vector<128x128xbf16>, vector<8x128xf32> -> vector<8x128xf32>
    %16 = vector.extract_strided_slice %0 {offsets = [1, 0], sizes = [1, 128], strides = [1, 1]} : vector<3x128xf32> to vector<1x128xf32>
    %17 = vector.broadcast %16 : vector<1x128xf32> to vector<8x128xf32>
    %18 = arith.addf %15, %17 : vector<8x128xf32>
    %cst_10 = arith.constant 0.000000e+00 : f32
    %19 = vector.broadcast %cst_10 : f32 to vector<8x128xf32>
    %20 = arith.maximumf %18, %19 : vector<8x128xf32>
    %c2 = arith.constant 2 : index
    %c0_11 = arith.constant 0 : index
    %c0_12 = arith.constant 0 : index
    %21 = vector.load %arg1[%c2, %c0_11, %c0_12] : memref<3x128x128xbf16, #tpu.memory_space<vmem>>, vector<1x128x128xbf16>
    %22 = vector.shape_cast %21 : vector<1x128x128xbf16> to vector<128x128xbf16>
    %23 = arith.truncf %20 : vector<8x128xf32> to vector<8x128xbf16>
    %cst_13 = arith.constant dense<0.000000e+00> : vector<8x128xf32>
    %24 = tpu.matmul %23, %22, %cst_13 {dimension_numbers = #tpu.dot_dimension_numbers<[1], [0], [0], [1], [0, 0, 1, 1], [], []>} : vector<8x128xbf16>, vector<128x128xbf16>, vector<8x128xf32> -> vector<8x128xf32>
    %25 = vector.extract_strided_slice %0 {offsets = [2, 0], sizes = [1, 128], strides = [1, 1]} : vector<3x128xf32> to vector<1x128xf32>
    %26 = vector.broadcast %25 : vector<1x128xf32> to vector<8x128xf32>
    %27 = arith.addf %24, %26 : vector<8x128xf32>
    %cst_14 = arith.constant 0.000000e+00 : f32
    %28 = vector.broadcast %cst_14 : f32 to vector<8x128xf32>
    %29 = arith.subf %28, %27 : vector<8x128xf32>
    %30 = math.exp %29 : vector<8x128xf32>
    %cst_15 = arith.constant 1.000000e+00 : f32
    %31 = vector.broadcast %cst_15 : f32 to vector<8x128xf32>
    %32 = arith.addf %31, %30 : vector<8x128xf32>
    %33 = tpu.reciprocal %32 : vector<8x128xf32> -> vector<8x128xf32>
    %c0_16 = arith.constant 0 : index
    %c0_17 = arith.constant 0 : index
    %34 = vector.load %arg3[%c0_16, %c0_17] : memref<8x128xf32, #tpu.memory_space<vmem>>, vector<8x128xf32>
    tpu.vector_store %arg3[%c0_16, %c0_17], %33 {strides = array<i32>} : memref<8x128xf32, #tpu.memory_space<vmem>>, vector<8x128xf32>,
    return
  }
}

</mosaic_0001>

<llo_original>
// kernel: mlp_forward.1
$region0: #{mlp_forward.1}
  #allocation0 [shape = 'u32[]', space=smem, size = 0x4, offset = 0x4, fixed_abs, tag = 'smem constant byte address 0x4 - core index']
  #allocation1 [shape = 'u32[144,128]{1,0:T(1,128)}', space=vmem, size = 0x12000, scoped, tag = 'internal scratch']
  %s0 = inlined_call_operand.vmem [shape: f32[8,16], index: 0, kind: input, shape index: {}]
  %s1 = inlined_call_operand.hbm [shape: bf16[3,128,128], index: 1, kind: input, shape index: {}]
  %s2 = inlined_call_operand.vmem [shape: f32[3,128], index: 2, kind: input, shape index: {}]
  %s3 = inlined_call_operand.vmem [shape: f32[8,128], index: 3, kind: output, shape index: {}]
  %s4 = sld [smem:[#allocation0]]
  $region26: #{mlp_forward.1} parent=0
    _
  %s6 = ssub.s32 1, %s4
  %s7 = scalar_select 0, %s6, %s4
  $region1: #{mlp_forward.1} parent=0
    #allocation2 [shape = 'u8[98304]{0}', space=vmem, size = 0x18000, scoped, tag = 'input window, operand 1, single buffered']
    #allocation3 [shape = 's32[1]{0}', space=sflag, size = 0x4, scoped, tag = 'scoped memory for mlp_forward.1']
    %8 = vsyncpa [#allocation3], 0
    // Predicated region
    $region2: #{mlp_forward.1} parent=1 // pred_check
      _
    $region3: #{mlp_forward.1} parent=1 // pred_check_branch
      %10 = sbr.rel (0) target = $region5
    $region4: #{mlp_forward.1} parent=1 // pred_region
      _
    $region5: #{mlp_forward.1} parent=1 // pred_fallthru
      _
    // Predicated region
    $region6: #{mlp_forward.1} parent=1 // pred_check
      _
    $region7: #{mlp_forward.1} parent=1 // pred_check_branch
      %12 = sbr.rel (0) target = $region9
    $region8: #{mlp_forward.1} parent=1 // pred_region
      %s14 = ssub.s32 3072, 3072
      %15 = vsyncadd [#allocation3], %s14
      %s16 = sshll.u32 [#allocation2], 4
      %s17 = int_to_ptr.vmem [resolvable:$true] %s16
      %22 = dma.hbm_to_vmem [thread:$0]  %s1, 3072, %s17, [#allocation3], 64, 64, 4
    $region9: #{mlp_forward.1} parent=1 // pred_fallthru
      _
    // Predicated region
    $region10: #{mlp_forward.1} parent=1 // pred_check
      _
    $region11: #{mlp_forward.1} parent=1 // pred_check_branch
      %24 = sbr.rel (0) target = $region13
    $region12: #{mlp_forward.1} parent=1 // pred_region
      _
    $region13: #{mlp_forward.1} parent=1 // pred_fallthru
      _
    // Predicated region
    $region14: #{mlp_forward.1} parent=1 // pred_check
      _
    $region15: #{mlp_forward.1} parent=1 // pred_check_branch
      %26 = sbr.rel (0) target = $region17
    $region16: #{mlp_forward.1} parent=1 // pred_region
      %27 = dma.done [#allocation3], 3072
    $region17: #{mlp_forward.1} parent=1 // pred_fallthru
      _
    %v29 = vld [vmem:[%s2] sm:$0x7]
    %v30 = vld [vmem:[%s0] sm:$0xff]
    %v31 = vld [vmem:[#allocation2] sm:$0xf]
    %v32 = vld [vmem:[#allocation2 + $0x4] sm:$0xf]
    %v33 = vpack.c.bf16 %v30, %v30
    %v34 = vlaneseq
    %v35 = vshrl.u32 %v34, 7
    %v36 = vsub.s32 0, %v35
    %v37 = vrot.slane %v29, %v36
    %v40 = vunpack.c.l.b16 %v31
    %v41 = vunpack.c.l.b16 %v32
    %v42 = vpack.c.b16 %v41, %v40
    %vm44 = vcmask 130048
    %v46 = vsel %vm44, %v33, 0
    %48 = vmatprep.subr.bf16.mxu0 0
    %49 = vmatpush1.bf16.msra.mxu0 %v42
    %50 = vmatprep.subr.bf16.mxu0 0
    %51 = vmatpush1.bf16.msra.mxu0 0
    %52 = vmatprep.subr.bf16.mxu0 0
    %53 = vmatpush1.bf16.msra.mxu0 0
    %54 = vmatprep.subr.bf16.mxu0 0
    %55 = vmatpush1.bf16.msra.mxu0 0
    %56 = vmatprep.subr.bf16.mxu0 0
    %57 = vmatpush1.bf16.msra.mxu0 0
    %58 = vmatprep.subr.bf16.mxu0 0
    %59 = vmatpush1.bf16.msra.mxu0 0
    %60 = vmatprep.subr.bf16.mxu0 0
    %61 = vmatpush1.bf16.msra.mxu0 0
    %62 = vmatprep.subr.bf16.mxu0 0
    %63 = vmatpush1.bf16.msra.mxu0 0
    %64 = vmatprep.subr.bf16.mxu0 0
    %65 = vmatpush1.bf16.msra.mxu0 0
    %66 = vmatprep.subr.bf16.mxu0 0
    %67 = vmatpush1.bf16.msra.mxu0 0
    %68 = vmatprep.subr.bf16.mxu0 0
    %69 = vmatpush1.bf16.msra.mxu0 0
    %70 = vmatprep.subr.bf16.mxu0 0
    %71 = vmatpush1.bf16.msra.mxu0 0
    %72 = vmatprep.subr.bf16.mxu0 0
    %73 = vmatpush1.bf16.msra.mxu0 0
    %74 = vmatprep.subr.bf16.mxu0 0
    %75 = vmatpush1.bf16.msra.mxu0 0
    %76 = vmatprep.subr.bf16.mxu0 0
    %77 = vmatpush1.bf16.msra.mxu0 0
    %78 = vmatprep.subr.bf16.mxu0 0
    %79 = vmatpush1.bf16.msra.mxu0 0
    %80 = vmatprep.mubr.bf16.mxu0 0
    %81 = vmatmul.mubr.bf16.gmra.mrb[0].mxu0 %v46
    %v82 = vpop.f32.mrb[0].mxu0
    %v83 = vadd.f32 %v37, %v82
    %v84 = vpop.f32.mrb[0].mxu0
    %v85 = vpop.f32.mrb[0].mxu0
    %v86 = vpop.f32.mrb[0].mxu0
    %87 = vdwg.mxu0
    %v88 = vmax.f32 %v83, 0.0
    %s89 = scalar_lea.vmem [#allocation2], 64
    %v90 = vld [vmem:[%s89] sm:$0xf]
    %v91 = vld [vmem:[%s89 + $0x4] sm:$0xf]
    %v92 = vld [vmem:[%s89 + $0x8] sm:$0xf]
    %v93 = vld [vmem:[%s89 + $0xc] sm:$0xf]
    %v94 = vld [vmem:[%s89 + $0x10] sm:$0xf]
    %v95 = vld [vmem:[%s89 + $0x14] sm:$0xf]
    %v96 = vld [vmem:[%s89 + $0x18] sm:$0xf]
    %v97 = vld [vmem:[%s89 + $0x1c] sm:$0xf]
    %v98 = vld [vmem:[%s89 + $0x20] sm:$0xf]
    %v99 = vld [vmem:[%s89 + $0x24] sm:$0xf]
    %v100 = vld [vmem:[%s89 + $0x28] sm:$0xf]
    %v101 = vld [vmem:[%s89 + $0x2c] sm:$0xf]
    %v102 = vld [vmem:[%s89 + $0x30] sm:$0xf]
    %v103 = vld [vmem:[%s89 + $0x34] sm:$0xf]
    %v104 = vld [vmem:[%s89 + $0x38] sm:$0xf]
    %v105 = vld [vmem:[%s89 + $0x3c] sm:$0xf]
    %v106 = vpack.c.bf16 %v88, %v88
    %v107 = vlaneseq
    %v108 = vshrl.u32 %v107, 7
    %v109 = vsub.s32 1, %v108
    %v110 = vrot.slane %v29, %v109
    %v127 = vunpack.c.l.b16 %v90
    %v128 = vunpack.c.l.b16 %v91
    %v129 = vunpack.c.l.b16 %v92
    %v130 = vunpack.c.l.b16 %v93
    %v131 = vunpack.c.l.b16 %v94
    %v132 = vunpack.c.l.b16 %v95
    %v133 = vunpack.c.l.b16 %v96
    %v134 = vunpack.c.l.b16 %v97
    %v135 = vunpack.c.l.b16 %v98
    %v136 = vunpack.c.l.b16 %v99
    %v137 = vunpack.c.l.b16 %v100
    %v138 = vunpack.c.l.b16 %v101
    %v139 = vunpack.c.l.b16 %v102
    %v140 = vunpack.c.l.b16 %v103
    %v141 = vunpack.c.l.b16 %v104
    %v142 = vunpack.c.l.b16 %v105
    %v143 = vpack.c.b16 %v128, %v127
    %v144 = vpack.c.b16 %v130, %v129
    %v145 = vpack.c.b16 %v132, %v131
    %v146 = vpack.c.b16 %v134, %v133
    %v147 = vpack.c.b16 %v136, %v135
    %v148 = vpack.c.b16 %v138, %v137
    %v149 = vpack.c.b16 %v140, %v139
    %v150 = vpack.c.b16 %v142, %v141
    %159 = vmatprep.subr.bf16.mxu0 0
    %160 = vmatpush1.bf16.msra.mxu0 %v143
    %161 = vmatprep.subr.bf16.mxu0 0
    %162 = vmatpush1.bf16.msra.mxu0 %v144
    %163 = vmatprep.subr.bf16.mxu0 0
    %164 = vmatpush1.bf16.msra.mxu0 %v145
    %165 = vmatprep.subr.bf16.mxu0 0
    %166 = vmatpush1.bf16.msra.mxu0 %v146
    %167 = vmatprep.subr.bf16.mxu0 0
    %168 = vmatpush1.bf16.msra.mxu0 %v147
    %169 = vmatprep.subr.bf16.mxu0 0
    %170 = vmatpush1.bf16.msra.mxu0 %v148
    %171 = vmatprep.subr.bf16.mxu0 0
    %172 = vmatpush1.bf16.msra.mxu0 %v149
    %173 = vmatprep.subr.bf16.mxu0 0
    %174 = vmatpush1.bf16.msra.mxu0 %v150
    %175 = vmatprep.subr.bf16.mxu0 0
    %176 = vmatpush1.bf16.msra.mxu0 0
    %177 = vmatprep.subr.bf16.mxu0 0
    %178 = vmatpush1.bf16.msra.mxu0 0
    %179 = vmatprep.subr.bf16.mxu0 0
    %180 = vmatpush1.bf16.msra.mxu0 0
    %181 = vmatprep.subr.bf16.mxu0 0
    %182 = vmatpush1.bf16.msra.mxu0 0
    %183 = vmatprep.subr.bf16.mxu0 0
    %184 = vmatpush1.bf16.msra.mxu0 0
    %185 = vmatprep.subr.bf16.mxu0 0
    %186 = vmatpush1.bf16.msra.mxu0 0
    %187 = vmatprep.subr.bf16.mxu0 0
    %188 = vmatpush1.bf16.msra.mxu0 0
    %189 = vmatprep.subr.bf16.mxu0 0
    %190 = vmatpush1.bf16.msra.mxu0 0
    %191 = vmatprep.mubr.bf16.mxu0 0
    %192 = vmatmul.mubr.bf16.gmra.mrb[0].mxu0 %v106
    %v193 = vpop.f32.mrb[0].mxu0
    %v194 = vadd.f32 %v110, %v193
    %v195 = vpop.f32.mrb[0].mxu0
    %v196 = vpop.f32.mrb[0].mxu0
    %v197 = vpop.f32.mrb[0].mxu0
    %198 = vdwg.mxu0
    %v199 = vmax.f32 %v194, 0.0
    %s200 = scalar_lea.vmem [#allocation2], 128
    %v201 = vld [vmem:[%s200] sm:$0xf]
    %v202 = vld [vmem:[%s200 + $0x4] sm:$0xf]
    %v203 = vld [vmem:[%s200 + $0x8] sm:$0xf]
    %v204 = vld [vmem:[%s200 + $0xc] sm:$0xf]
    %v205 = vld [vmem:[%s200 + $0x10] sm:$0xf]
    %v206 = vld [vmem:[%s200 + $0x14] sm:$0xf]
    %v207 = vld [vmem:[%s200 + $0x18] sm:$0xf]
    %v208 = vld [vmem:[%s200 + $0x1c] sm:$0xf]
    %v209 = vld [vmem:[%s200 + $0x20] sm:$0xf]
    %v210 = vld [vmem:[%s200 + $0x24] sm:$0xf]
    %v211 = vld [vmem:[%s200 + $0x28] sm:$0xf]
    %v212 = vld [vmem:[%s200 + $0x2c] sm:$0xf]
    %v213 = vld [vmem:[%s200 + $0x30] sm:$0xf]
    %v214 = vld [vmem:[%s200 + $0x34] sm:$0xf]
    %v215 = vld [vmem:[%s200 + $0x38] sm:$0xf]
    %v216 = vld [vmem:[%s200 + $0x3c] sm:$0xf]
    %v217 = vpack.c.bf16 %v199, %v199
    %v218 = vlaneseq
    %v219 = vshrl.u32 %v218, 7
    %v220 = vsub.s32 2, %v219
    %v221 = vrot.slane %v29, %v220
    %v238 = vunpack.c.l.b16 %v201
    %v239 = vunpack.c.l.b16 %v202
    %v240 = vunpack.c.l.b16 %v203
    %v241 = vunpack.c.l.b16 %v204
    %v242 = vunpack.c.l.b16 %v205
    %v243 = vunpack.c.l.b16 %v206
    %v244 = vunpack.c.l.b16 %v207
    %v245 = vunpack.c.l.b16 %v208
    %v246 = vunpack.c.l.b16 %v209
    %v247 = vunpack.c.l.b16 %v210
    %v248 = vunpack.c.l.b16 %v211
    %v249 = vunpack.c.l.b16 %v212
    %v250 = vunpack.c.l.b16 %v213
    %v251 = vunpack.c.l.b16 %v214
    %v252 = vunpack.c.l.b16 %v215
    %v253 = vunpack.c.l.b16 %v216
    %v254 = vpack.c.b16 %v239, %v238
    %v255 = vpack.c.b16 %v241, %v240
    %v256 = vpack.c.b16 %v243, %v242
    %v257 = vpack.c.b16 %v245, %v244
    %v258 = vpack.c.b16 %v247, %v246
    %v259 = vpack.c.b16 %v249, %v248
    %v260 = vpack.c.b16 %v251, %v250
    %v261 = vpack.c.b16 %v253, %v252
    %270 = vmatprep.subr.bf16.mxu0 0
    %271 = vmatpush1.bf16.msra.mxu0 %v254
    %272 = vmatprep.subr.bf16.mxu0 0
    %273 = vmatpush1.bf16.msra.mxu0 %v255
    %274 = vmatprep.subr.bf16.mxu0 0
    %275 = vmatpush1.bf16.msra.mxu0 %v256
    %276 = vmatprep.subr.bf16.mxu0 0
    %277 = vmatpush1.bf16.msra.mxu0 %v257
    %278 = vmatprep.subr.bf16.mxu0 0
    %279 = vmatpush1.bf16.msra.mxu0 %v258
    %280 = vmatprep.subr.bf16.mxu0 0
    %281 = vmatpush1.bf16.msra.mxu0 %v259
    %282 = vmatprep.subr.bf16.mxu0 0
    %283 = vmatpush1.bf16.msra.mxu0 %v260
    %284 = vmatprep.subr.bf16.mxu0 0
    %285 = vmatpush1.bf16.msra.mxu0 %v261
    %286 = vmatprep.subr.bf16.mxu0 0
    %287 = vmatpush1.bf16.msra.mxu0 0
    %288 = vmatprep.subr.bf16.mxu0 0
    %289 = vmatpush1.bf16.msra.mxu0 0
    %290 = vmatprep.subr.bf16.mxu0 0
    %291 = vmatpush1.bf16.msra.mxu0 0
    %292 = vmatprep.subr.bf16.mxu0 0
    %293 = vmatpush1.bf16.msra.mxu0 0
    %294 = vmatprep.subr.bf16.mxu0 0
    %295 = vmatpush1.bf16.msra.mxu0 0
    %296 = vmatprep.subr.bf16.mxu0 0
    %297 = vmatpush1.bf16.msra.mxu0 0
    %298 = vmatprep.subr.bf16.mxu0 0
    %299 = vmatpush1.bf16.msra.mxu0 0
    %300 = vmatprep.subr.bf16.mxu0 0
    %301 = vmatpush1.bf16.msra.mxu0 0
    %302 = vmatprep.mubr.bf16.mxu0 0
    %303 = vmatmul.mubr.bf16.gmra.mrb[0].mxu0 %v217
    %v304 = vpop.f32.mrb[0].mxu0
    %v305 = vadd.f32 %v221, %v304
    %v306 = vpop.f32.mrb[0].mxu0
    %v307 = vpop.f32.mrb[0].mxu0
    %v308 = vpop.f32.mrb[0].mxu0
    %309 = vdwg.mxu0
    %v310 = vsub.f32 0.0, %v305
    %v311 = vmul.f32 %v310, 1.442695
    %v312 = vpow.pop %v311
    %v313 = vadd.f32 %v312, 1.0
    %v314 = vrcp.pop %v313
    %315 = vst [vmem:[%s3] sm:$0xff] %v314
    // Predicated region
    $region18: #{mlp_forward.1} parent=1 // pred_check
      _
    $region19: #{mlp_forward.1} parent=1 // pred_check_branch
      %317 = sbr.rel (0) target = $region21
    $region20: #{mlp_forward.1} parent=1 // pred_region
      _
    $region21: #{mlp_forward.1} parent=1 // pred_fallthru
      _
    // Predicated region
    $region22: #{mlp_forward.1} parent=1 // pred_check
      _
    $region23: #{mlp_forward.1} parent=1 // pred_check_branch
      %319 = sbr.rel (0) target = $region25
    $region24: #{mlp_forward.1} parent=1 // pred_region
      _
    $region25: #{mlp_forward.1} parent=1 // pred_fallthru
      _
    %320 = vsyncpa [#allocation3], 1

</llo_original>
